<compile_context>
chip_gen: v7x
topology: tpu7x:2x2x1
jax: 0.10.0
libtpu: 0.0.40
codegen_flags: <defaults>
</compile_context>

<pallas_src>
import jax
import jax.numpy as jnp
from jax.experimental import pallas as pl
from jax.experimental.pallas import tpu as pltpu


def _round_up(x, m):
    return ((x + m - 1) // m) * m


_VMEM_WINDOW_BUDGET = 40 << 20     # bytes for the double-buffered x + out windows
_VMEM_LIMIT_BYTES = 48 << 20       # scoped VMEM limit (fits v7x's 64 MiB physical VMEM)
_TM_CAP = 32768


def _pick_tiling(m, lane, r_rows, x_itemsize, out_itemsize):
    """Pick (row-tile size, tile count) for an (m, lane) input / (m, r_rows) output."""
    if m <= 8:
        return m, 1                                  # single full-extent block
    lane_vmem = _round_up(lane, 128)                 # VMEM pads the lane axis to 128
    out_lane_vmem = _round_up(r_rows, 128)
    bytes_per_row = x_itemsize * lane_vmem + out_itemsize * out_lane_vmem
    cap = _VMEM_WINDOW_BUDGET // (2 * bytes_per_row)  # 2 = double buffering
    cap = max(8, min(_TM_CAP, (cap // 8) * 8))
    tm = min(cap, _round_up(m, 8))
    n_tiles = -(-m // tm)
    # v7x has 2 TensorCores sharing the "parallel" grid axis; prefer an even
    # number of tiles so neither core idles.  No effect on v5e/v6e.
    if n_tiles == 1:
        n_tiles = 2
    elif n_tiles % 2 == 1:
        n_tiles += 1
    tm = max(8, _round_up(-(-m // n_tiles), 8))
    n_tiles = -(-m // tm)
    return tm, n_tiles


def _disc_kernel(x_ref, w_ref, b_ref, o_ref):
    # x_ref: (tm, lane) VMEM    b_ref: (1,) f32 SMEM    o_ref: (tm, r_rows) VMEM
    # w_ref: (1, lane) row when r_rows == 1 (multiply + lane-reduce, no MXU),
    #        (lane, r_rows) block-diagonal when rows are lane-packed (MXU dot).
    x = x_ref[...]
    r_rows = o_ref.shape[-1]
    if r_rows == 1:
        logits = jnp.sum(
            x.astype(jnp.float32) * w_ref[...].astype(jnp.float32),
            axis=-1, keepdims=True)                                   # (tm, 1)
    else:
        logits = jnp.dot(x, w_ref[...],
                         preferred_element_type=jnp.float32)          # (tm, r_rows)
    logits = logits + b_ref[0]
    o_ref[...] = (1.0 / (1.0 + jnp.exp(-logits))).astype(o_ref.dtype)


def discriminator_forward(x, weight, bias, alpha=1.0, *, min_rows_for_pallas=4096):
    """Forward pass of Discriminator: sigmoid(x @ weight.T + bias).

    x:      (..., d_common)
    weight: (1, d_common)   (PyTorch nn.Linear layout: out_features x in_features)
    bias:   (1,)
    alpha:  GRL scale; the GRL is the identity in the forward pass (unused here).
    Returns (..., 1) in x.dtype.
    """
    del alpha  # GRL is identity in the forward pass.
    d = x.shape[-1]
    lead = x.shape[:-1]
    dtype = x.dtype
    x2d = x.reshape(-1, d)
    n = x2d.shape[0]

    # NOTE: weight is cast to x.dtype with an f32 accumulator; bf16 activations
    # may round slightly differently than a framework keeping the weight in f32.
    w_row = weight.reshape(1, d).astype(dtype)
    b_vec = bias.reshape(1).astype(jnp.float32)

    # Tiny inputs: a fused XLA epilogue beats kernel launch + wrapper reshapes.
    if n == 0 or n < min_rows_for_pallas:
        out = jax.nn.sigmoid(
            x2d.astype(jnp.float32) @ w_row.astype(jnp.float32).T + b_vec
        ).astype(dtype)
        return out.reshape(*lead, 1)

    # Feature packing (only when free): pack = 128 // d rows per 128-lane row.
    pack = 1
    lane = d
    if d < 128 and 128 % d == 0 and n % (128 // d) == 0:
        pack = 128 // d
        lane = 128
    m = n // pack
    xp = x2d.reshape(m, lane)        # contiguous reshape: no HBM copy under jit
    r_rows = pack

    if pack > 1:
        # Block-diagonal weight: packed row p dots against its own weight copy.
        w_arg = jnp.kron(jnp.eye(pack, dtype=dtype), w_row).T    # (128, pack)
    else:
        w_arg = w_row                                            # (1, d) row

    x_itemsize = jnp.dtype(dtype).itemsize
    tm, n_tiles = _pick_tiling(m, lane, r_rows, x_itemsize, x_itemsize)

    out2d = pl.pallas_call(
        _disc_kernel,
        out_shape=jax.ShapeDtypeStruct((m, r_rows), dtype),
        grid_spec=pltpu.PrefetchScalarGridSpec(
            num_scalar_prefetch=0,
            grid=(n_tiles,),
            in_specs=[
                pl.BlockSpec((tm, lane), lambda i: (i, 0)),
                pl.BlockSpec(w_arg.shape, lambda i: (0, 0)),     # resident weight
                pl.BlockSpec(memory_space=pltpu.MemorySpace.SMEM),
            ],
            out_specs=pl.BlockSpec((tm, r_rows), lambda i: (i, 0)),
        ),
        compiler_params=pltpu.CompilerParams(
            dimension_semantics=("parallel",),
            vmem_limit_bytes=_VMEM_LIMIT_BYTES,
        ),
        cost_estimate=pl.CostEstimate(
            flops=int(2 * n * d),
            transcendentals=int(n),
            bytes_accessed=int(n * d * x_itemsize + n * x_itemsize + (d + 1) * 4),
        ),
    )(xp, w_arg, b_vec)

    # (m, pack) row-major order == original row order; plain reshape, no transpose.
    out = out2d.reshape(n, 1)
    return out.reshape(*lead, 1)


def init_discriminator_params(d_common, key):
    """Matches nn.init.normal_(std=0.01) for weight and bias."""
    kw, kb = jax.random.split(key)
    weight = 0.01 * jax.random.normal(kw, (1, d_common), dtype=jnp.float32)
    bias = 0.01 * jax.random.normal(kb, (1,), dtype=jnp.float32)
    return weight, bias


def _reference(x, weight, bias):
    return jax.nn.sigmoid(x @ weight.T + bias)


if __name__ == "__main__":
    key = jax.random.PRNGKey(0)
    k1, k2, k3, k4, k5, k6 = jax.random.split(key, 6)

    fwd = jax.jit(discriminator_forward, static_argnames=("min_rows_for_pallas",))
    alpha = 0.5  # GRL scale; identity in the forward pass

    # Case 1: small d_common, n % pack == 0 -> lane-packed path (pack=4).
    batch, seq, d_common = 2, 8, 32
    x1 = jax.random.normal(k1, (batch, seq, d_common), dtype=jnp.float32)
    w1, b1 = init_discriminator_params(d_common, k2)
    out1 = jax.block_until_ready(fwd(x1, w1, b1, alpha, min_rows_for_pallas=0))
    ref1 = _reference(x1, w1, b1)
    assert out1.shape == (batch, seq, 1), out1.shape
    assert jnp.allclose(out1, ref1, atol=1e-5), float(jnp.max(jnp.abs(out1 - ref1)))

    # Case 2: d_common >= 128, ragged row count -> unpacked path, 2 grid tiles
    # with a partial trailing block (no padding copies anywhere).
    b2, s2, d2 = 3, 5, 256
    x2 = jax.random.normal(k3, (b2, s2, d2), dtype=jnp.float32)
    w2, bias2 = init_discriminator_params(d2, k4)
    out2 = jax.block_until_ready(fwd(x2, w2, bias2, alpha, min_rows_for_pallas=0))
    ref2 = _reference(x2, w2, bias2)
    assert out2.shape == (b2, s2, 1), out2.shape
    assert jnp.allclose(out2, ref2, atol=1e-5), float(jnp.max(jnp.abs(out2 - ref2)))

    # Case 3: small d_common but n % pack != 0 -> packing disabled (lane = d), ragged grid.
    b3, s3, d3 = 3, 5, 32
    x3 = jax.random.normal(k5, (b3, s3, d3), dtype=jnp.float32)
    w3, bias3 = init_discriminator_params(d3, k6)
    out3 = jax.block_until_ready(fwd(x3, w3, bias3, alpha, min_rows_for_pallas=0))
    ref3 = _reference(x3, w3, bias3)
    assert out3.shape == (b3, s3, 1), out3.shape
    assert jnp.allclose(out3, ref3, atol=1e-5), float(jnp.max(jnp.abs(out3 - ref3)))

    # Case 4: default threshold -> tiny inputs take the fused-XLA fast path.
    out4 = jax.block_until_ready(fwd(x1, w1, b1, alpha))
    assert jnp.allclose(out4, ref1, atol=1e-5), float(jnp.max(jnp.abs(out4 - ref1)))

    print("KERNEL_OK")
</pallas_src>

<mosaic_0001>
module attributes {stable_mosaic.version = 11 : i64} {
  func.func @_disc_kernel(%arg0: i32, %arg1: memref<4x128xf32, #tpu.memory_space<vmem>>, %arg2: memref<128x4xf32, #tpu.memory_space<vmem>>, %arg3: memref<1xf32, #tpu.memory_space<smem>>, %arg4: memref<4x4xf32, #tpu.memory_space<vmem>>) attributes {dimension_semantics = [#tpu.dimension_semantics<parallel>], iteration_bounds = array<i64: 1>, scalar_prefetch = 0 : i64, scratch_operands = 0 : i64, tpu.core_type = #tpu.core_type<tc>, window_params = [{transform_indices = @transform_0, window_bounds = array<i64: 4, 128>}, {pipeline_mode = #tpu.pipeline_mode<synchronous>, transform_indices = @transform_1, window_bounds = array<i64: 128, 4>}, {transform_indices = @transform_2, window_bounds = array<i64: 1>}, {transform_indices = @transform_3, window_bounds = array<i64: 4, 4>}]} {
    %c0 = arith.constant 0 : index
    %c0_0 = arith.constant 0 : index
    %0 = vector.load %arg1[%c0, %c0_0] : memref<4x128xf32, #tpu.memory_space<vmem>>, vector<4x128xf32>
    %c0_1 = arith.constant 0 : index
    %c0_2 = arith.constant 0 : index
    %1 = vector.load %arg2[%c0_1, %c0_2] : memref<128x4xf32, #tpu.memory_space<vmem>>, vector<128x4xf32>
    %cst = arith.constant dense<0.000000e+00> : vector<4x4xf32>
    %2 = tpu.matmul %0, %1, %cst {dimension_numbers = #tpu.dot_dimension_numbers<[1], [0], [0], [1], [0, 0, 1, 1], [], []>} : vector<4x128xf32>, vector<128x4xf32>, vector<4x4xf32> -> vector<4x4xf32>
    %c0_3 = arith.constant 0 : index
    %3 = memref.load %arg3[%c0_3] : memref<1xf32, #tpu.memory_space<smem>>
    %4 = vector.broadcast %3 : f32 to vector<4x4xf32>
    %5 = arith.addf %2, %4 : vector<4x4xf32>
    %cst_4 = arith.constant 0.000000e+00 : f32
    %6 = vector.broadcast %cst_4 : f32 to vector<4x4xf32>
    %7 = arith.subf %6, %5 : vector<4x4xf32>
    %8 = math.exp %7 : vector<4x4xf32>
    %cst_5 = arith.constant 1.000000e+00 : f32
    %9 = vector.broadcast %cst_5 : f32 to vector<4x4xf32>
    %10 = arith.addf %9, %8 : vector<4x4xf32>
    %cst_6 = arith.constant 1.000000e+00 : f32
    %11 = vector.broadcast %cst_6 : f32 to vector<4x4xf32>
    %12 = arith.divf %11, %10 : vector<4x4xf32>
    %c0_7 = arith.constant 0 : index
    %c0_8 = arith.constant 0 : index
    %13 = vector.load %arg4[%c0_7, %c0_8] : memref<4x4xf32, #tpu.memory_space<vmem>>, vector<4x4xf32>
    tpu.vector_store %arg4[%c0_7, %c0_8], %12 {strides = array<i32>} : memref<4x4xf32, #tpu.memory_space<vmem>>, vector<4x4xf32>,
    return
  }
  func.func @transform_0(%arg0: i32) -> (i32, i32) {
    %c0_i32 = arith.constant 0 : i32
    %c0_i32_0 = arith.constant 0 : i32
    return %arg0, %c0_i32 : i32, i32
  }
  func.func @transform_1(%arg0: i32) -> (i32, i32) {
    %c0_i32 = arith.constant 0 : i32
    %c0_i32_0 = arith.constant 0 : i32
    %c0_i32_1 = arith.constant 0 : i32
    return %c0_i32, %c0_i32_0 : i32, i32
  }
  func.func @transform_2(%arg0: i32) -> i32 {
    %c0_i32 = arith.constant 0 : i32
    %c0_i32_0 = arith.constant 0 : i32
    return %c0_i32 : i32
  }
  func.func @transform_3(%arg0: i32) -> (i32, i32) {
    %c0_i32 = arith.constant 0 : i32
    %c0_i32_0 = arith.constant 0 : i32
    return %arg0, %c0_i32 : i32, i32
  }
}

</mosaic_0001>

<llo_original>
// kernel: discriminator_forward.1
$region0: #{discriminator_forward.1}
  #allocation0 [shape = 'u32[]', space=smem, size = 0x4, offset = 0x4, fixed_abs, tag = 'smem constant byte address 0x4 - core index']
  #allocation1 [shape = 'u32[144,128]{1,0:T(1,128)}', space=vmem, size = 0x12000, scoped, tag = 'internal scratch']
  #allocation2 [shape = 'f32[1]{0:T(128)S(6)}', space=smem, size = 0x200, scoped, tag = 'scoped memory for discriminator_forward.1']
  %s0 = inlined_call_operand.vmem [shape: f32[4,128], index: 0, kind: input, shape index: {}]
  %s1 = inlined_call_operand.vmem [shape: f32[128,4], index: 1, kind: input, shape index: {}]
  %s2 = inlined_call_operand.<no memory space> [shape: f32[1], index: 2, kind: input, shape index: {}]
  %s3 = inlined_call_operand.vmem [shape: f32[4,4], index: 3, kind: output, shape index: {}]
  %s4 = sld [smem:[#allocation0]]
  $region22: #{discriminator_forward.1} parent=0
    _
  %s6 = ssub.s32 1, %s4
  %s7 = scalar_select 0, %s6, %s4
  %8 = sst [smem:[#allocation2]] %s2
  // Predicated region
  $region2: #{discriminator_forward.1} parent=0 // pred_check
    _
  $region3: #{discriminator_forward.1} parent=0 // pred_check_branch
    %10 = sbr.rel (0) target = $region5
  $region4: #{discriminator_forward.1} parent=0 // pred_region
    _
  $region5: #{discriminator_forward.1} parent=0 // pred_fallthru
    _
  // Predicated region
  $region6: #{discriminator_forward.1} parent=0 // pred_check
    _
  $region7: #{discriminator_forward.1} parent=0 // pred_check_branch
    %12 = sbr.rel (0) target = $region9
  $region8: #{discriminator_forward.1} parent=0 // pred_region
    _
  $region9: #{discriminator_forward.1} parent=0 // pred_fallthru
    _
  // Predicated region
  $region10: #{discriminator_forward.1} parent=0 // pred_check
    _
  $region11: #{discriminator_forward.1} parent=0 // pred_check_branch
    %14 = sbr.rel (0) target = $region13
  $region12: #{discriminator_forward.1} parent=0 // pred_region
    _
  $region13: #{discriminator_forward.1} parent=0 // pred_fallthru
    _
  %v15 = vld [vmem:[%s0] sm:$0xf]
  %v16 = vld [vmem:[%s1] sm:$0xff]
  %v17 = vld [vmem:[%s1 + $0x8] sm:$0xff]
  %v18 = vld [vmem:[%s1 + $0x10] sm:$0xff]
  %v19 = vld [vmem:[%s1 + $0x18] sm:$0xff]
  %v20 = vld [vmem:[%s1 + $0x20] sm:$0xff]
  %v21 = vld [vmem:[%s1 + $0x28] sm:$0xff]
  %v22 = vld [vmem:[%s1 + $0x30] sm:$0xff]
  %v23 = vld [vmem:[%s1 + $0x38] sm:$0xff]
  %v24 = vld [vmem:[%s1 + $0x40] sm:$0xff]
  %v25 = vld [vmem:[%s1 + $0x48] sm:$0xff]
  %v26 = vld [vmem:[%s1 + $0x50] sm:$0xff]
  %v27 = vld [vmem:[%s1 + $0x58] sm:$0xff]
  %v28 = vld [vmem:[%s1 + $0x60] sm:$0xff]
  %v29 = vld [vmem:[%s1 + $0x68] sm:$0xff]
  %v30 = vld [vmem:[%s1 + $0x70] sm:$0xff]
  %v31 = vld [vmem:[%s1 + $0x78] sm:$0xff]
  %s32 = sld [smem:[#allocation2]]
  %v33 = vstv %s32
  %34 = vmatprep.subr.mxu0 0.0
  %35 = vmatpush1.msra.mxu0 %v16
  %36 = vmatprep.subr.mxu0 0.0
  %37 = vmatpush1.msra.mxu0 %v17
  %38 = vmatprep.subr.mxu0 0.0
  %39 = vmatpush1.msra.mxu0 %v18
  %40 = vmatprep.subr.mxu0 0.0
  %41 = vmatpush1.msra.mxu0 %v19
  %42 = vmatprep.subr.mxu0 0.0
  %43 = vmatpush1.msra.mxu0 %v20
  %44 = vmatprep.subr.mxu0 0.0
  %45 = vmatpush1.msra.mxu0 %v21
  %46 = vmatprep.subr.mxu0 0.0
  %47 = vmatpush1.msra.mxu0 %v22
  %48 = vmatprep.subr.mxu0 0.0
  %49 = vmatpush1.msra.mxu0 %v23
  %50 = vmatprep.subr.mxu0 0.0
  %51 = vmatpush1.msra.mxu0 %v24
  %52 = vmatprep.subr.mxu0 0.0
  %53 = vmatpush1.msra.mxu0 %v25
  %54 = vmatprep.subr.mxu0 0.0
  %55 = vmatpush1.msra.mxu0 %v26
  %56 = vmatprep.subr.mxu0 0.0
  %57 = vmatpush1.msra.mxu0 %v27
  %58 = vmatprep.subr.mxu0 0.0
  %59 = vmatpush1.msra.mxu0 %v28
  %60 = vmatprep.subr.mxu0 0.0
  %61 = vmatpush1.msra.mxu0 %v29
  %62 = vmatprep.subr.mxu0 0.0
  %63 = vmatpush1.msra.mxu0 %v30
  %64 = vmatprep.subr.mxu0 0.0
  %65 = vmatpush1.msra.mxu0 %v31
  %66 = vmatprep.subr.mxu0 0.0
  %67 = vmatpush1.msra.mxu0 0.0
  %68 = vmatprep.subr.mxu0 0.0
  %69 = vmatpush1.msra.mxu0 0.0
  %70 = vmatprep.subr.mxu0 0.0
  %71 = vmatpush1.msra.mxu0 0.0
  %72 = vmatprep.subr.mxu0 0.0
  %73 = vmatpush1.msra.mxu0 0.0
  %74 = vmatprep.subr.mxu0 0.0
  %75 = vmatpush1.msra.mxu0 0.0
  %76 = vmatprep.subr.mxu0 0.0
  %77 = vmatpush1.msra.mxu0 0.0
  %78 = vmatprep.subr.mxu0 0.0
  %79 = vmatpush1.msra.mxu0 0.0
  %80 = vmatprep.subr.mxu0 0.0
  %81 = vmatpush1.msra.mxu0 0.0
  %82 = vmatprep.subr.mxu0 0.0
  %83 = vmatpush1.msra.mxu0 0.0
  %84 = vmatprep.subr.mxu0 0.0
  %85 = vmatpush1.msra.mxu0 0.0
  %86 = vmatprep.subr.mxu0 0.0
  %87 = vmatpush1.msra.mxu0 0.0
  %88 = vmatprep.subr.mxu0 0.0
  %89 = vmatpush1.msra.mxu0 0.0
  %90 = vmatprep.subr.mxu0 0.0
  %91 = vmatpush1.msra.mxu0 0.0
  %92 = vmatprep.subr.mxu0 0.0
  %93 = vmatpush1.msra.mxu0 0.0
  %94 = vmatprep.subr.mxu0 0.0
  %95 = vmatpush1.msra.mxu0 0.0
  %96 = vmatprep.subr.mxu0 0.0
  %97 = vmatpush1.msra.mxu0 0.0
  %98 = vmatprep.mubr.f32.mxu0 0.0
  %99 = vmatmul.mubr.f32.gmra.mrb[0].mxu0 %v15
  %v100 = vpop.f32.mrb[0].mxu0
  %v101 = vadd.f32 %v33, %v100
  %v102 = vpop.f32.mrb[0].mxu0
  %103 = vdwg.mxu0
  %v104 = vsub.f32 0.0, %v101
  %v105 = vmul.f32 %v104, 1.442695
  %v106 = vpow.pop %v105
  %v107 = vadd.f32 %v106, 1.0
  %v108 = vrcp.pop %v107
  %v109 = vmul.f32 1.0, %v108
  %vm110 = vcmask 27648
  %111 = vst.msk [vmem:[%s3] sm:$0xf] %vm110, %v109
  // Predicated region
  $region14: #{discriminator_forward.1} parent=0 // pred_check
    _
  $region15: #{discriminator_forward.1} parent=0 // pred_check_branch
    %113 = sbr.rel (0) target = $region17
  $region16: #{discriminator_forward.1} parent=0 // pred_region
    _
  $region17: #{discriminator_forward.1} parent=0 // pred_fallthru
    _
  // Predicated region
  $region18: #{discriminator_forward.1} parent=0 // pred_check
    _
  $region19: #{discriminator_forward.1} parent=0 // pred_check_branch
    %115 = sbr.rel (0) target = $region21
  $region20: #{discriminator_forward.1} parent=0 // pred_region
    _
  $region21: #{discriminator_forward.1} parent=0 // pred_fallthru
    _

</llo_original>
